<compile_context>
chip_gen: v5e
topology: v5e:2x2
jax: 0.10.0
libtpu: 0.0.40
codegen_flags: <defaults>
</compile_context>

<pallas_src>
import functools

import jax
import jax.numpy as jnp
from jax.experimental import pallas as pl
from jax.experimental.pallas import tpu as pltpu


def _embeddings_ln_kernel(we_ref, posmix_ref, prefix_ref, gamma_ref, beta_ref,
                          out_ref, e_ref, *, eps, prefix_len, tile_s):
    """One (seq-tile, batch) step: merge embeddings + LayerNorm.

    we_ref:     (tile_s, H)  gathered word-embedding rows for this seq tile
    posmix_ref: (tile_s, H)  position_emb rows + token_type_emb[0] (pre-folded)
    prefix_ref: (P, H)       [visual | video_time | color] rows for this batch
    gamma/beta: (1, H)       LayerNorm affine params
    e_ref:      (tile_s, H)  f32 VMEM scratch holding the pre-LN embeddings
    """
    # Main path: gathered word rows + (position + token-type) rows.
    e_ref[...] = (we_ref[...].astype(jnp.float32)
                  + posmix_ref[...].astype(jnp.float32))

    # Overwrite the rows belonging to the visual/video_time/color prefix.
    # prefix_len and tile_s are static, so the set of affected seq tiles is
    # static; guard each with pl.when on the (traced) seq-tile index.
    s_idx = pl.program_id(0)
    n_prefix_tiles = -(-prefix_len // tile_s)
    for t in range(n_prefix_tiles):
        lo = t * tile_s
        rows = min(tile_s, prefix_len - lo)

        @pl.when(s_idx == t)
        def _(lo=lo, rows=rows):
            e_ref[0:rows, :] = (prefix_ref[lo:lo + rows, :].astype(jnp.float32)
                                + posmix_ref[0:rows, :].astype(jnp.float32))

    # Row-wise LayerNorm: single pass, f32 stats, variance clamped >= 0 so
    # f32 cancellation can never feed rsqrt a negative number.
    e = e_ref[...]
    mean = jnp.mean(e, axis=-1, keepdims=True)
    mean_sq = jnp.mean(e * e, axis=-1, keepdims=True)
    var = jnp.maximum(mean_sq - mean * mean, 0.0)
    y = (e - mean) * jax.lax.rsqrt(var + eps)
    y = y * gamma_ref[...].astype(jnp.float32) + beta_ref[...].astype(jnp.float32)
    out_ref[...] = y.astype(out_ref.dtype)


def my_bert_embeddings(input_ids, visual, video_time, color, params, *,
                       layer_norm_eps=1e-12, tile_s=512, out_dtype=None):
    """input_ids: [B, S] int32; visual: [B, Sv, H]; video_time/color: [B, H]."""
    B, S = input_ids.shape
    Sv, H = visual.shape[1], visual.shape[2]
    P = Sv + 2                        # visual + video_time + color prefix rows

    word_emb = params["word_emb"]
    # token_type_ids are all zero -> fold that single row into the position
    # table once (tiny, S*H elements) so the kernel has one fewer input stream.
    posmix = params["pos_emb"][:S] + params["type_emb"][0][None, :]
    gamma = params["ln_gamma"].reshape(1, H).astype(jnp.float32)
    beta = params["ln_beta"].reshape(1, H).astype(jnp.float32)

    # Small per-batch prefix rows (B*P*H elements; negligible traffic).
    prefix = jnp.concatenate(
        [visual, video_time[:, None, :], color[:, None, :]], axis=1)

    # Single XLA gather over the FULL sequence.  Prefix slots gather row 0;
    # their values are overwritten in-kernel, so no [B,S,H] concat/pad copies.
    ids_full = jnp.concatenate(
        [jnp.zeros((B, P), input_ids.dtype), input_ids[:, P:]], axis=1)
    we = jnp.take(word_emb, ids_full, axis=0)                       # [B, S, H]

    out_dtype = out_dtype or we.dtype

    # ---- seq tiling: big lane-dense tiles, no host-side padding ----
    cap = max(8, (int(tile_s) // 8) * 8)
    if S <= cap:
        tile = S                      # equals full seq dim -> always legal
    else:
        tile = cap                    # multiple of 8; last block may be partial
    n_s = pl.cdiv(S, tile)
    # v7x has two TensorCores: avoid a degenerate 1x1 parallel grid.
    if B * n_s < 2 and S > 8:
        tile = max(8, ((-(-S // 2)) + 7) // 8 * 8)
        n_s = pl.cdiv(S, tile)

    elem = jnp.dtype(we.dtype).itemsize
    out_elem = jnp.dtype(out_dtype).itemsize
    cost = pl.CostEstimate(
        flops=int(9 * B * S * H),
        transcendentals=int(B * S),                  # one rsqrt per row
        bytes_accessed=int(B * S * H * elem          # gathered word rows (read)
                           + S * H * 4               # pos+type table (read once)
                           + n_s * B * P * H * 4     # prefix rows (per step)
                           + 2 * H * 4               # gamma/beta
                           + B * S * H * out_elem))  # output (write)

    kernel = functools.partial(_embeddings_ln_kernel, eps=layer_norm_eps,
                               prefix_len=P, tile_s=tile)

    out = pl.pallas_call(
        kernel,
        out_shape=jax.ShapeDtypeStruct((B, S, H), out_dtype),
        grid_spec=pltpu.PrefetchScalarGridSpec(
            num_scalar_prefetch=0,
            grid=(n_s, B),            # batch innermost -> pos tile DMA'd once/s
            in_specs=[
                pl.BlockSpec((pl.Squeezed(), tile, H), lambda s, b: (b, s, 0)),
                pl.BlockSpec((tile, H), lambda s, b: (s, 0)),
                pl.BlockSpec((pl.Squeezed(), P, H), lambda s, b: (b, 0, 0)),
                pl.BlockSpec((1, H), lambda s, b: (0, 0)),
                pl.BlockSpec((1, H), lambda s, b: (0, 0)),
            ],
            out_specs=pl.BlockSpec((pl.Squeezed(), tile, H),
                                   lambda s, b: (b, s, 0)),
            scratch_shapes=[pltpu.VMEM((tile, H), jnp.float32)],
        ),
        compiler_params=pltpu.CompilerParams(
            dimension_semantics=("parallel", "parallel"),
            vmem_limit_bytes=32 * 1024 * 1024),
        cost_estimate=cost,
    )(we, posmix, prefix, gamma, beta)

    # TODO(synk): nn.Dropout is identity in eval mode; training-mode stochastic
    # dropout (pltpu.prng_*) is intentionally not applied here.
    return out


def _reference(input_ids, visual, video_time, color, params, eps):
    Sv = visual.shape[1]
    text_ids = input_ids[:, Sv + 2:]
    we = params["word_emb"][text_ids]
    emb = jnp.concatenate(
        [visual, video_time[:, None, :], color[:, None, :], we], axis=1)
    S = emb.shape[1]
    emb = (emb + params["pos_emb"][:S][None, :, :]
           + params["type_emb"][0][None, None, :])
    mean = emb.mean(-1, keepdims=True)
    var = ((emb - mean) ** 2).mean(-1, keepdims=True)
    out = (emb - mean) / jnp.sqrt(var + eps)
    return out * params["ln_gamma"] + params["ln_beta"]


def init_params(key, vocab_size, hidden_size, max_position_embeddings,
                type_vocab_size, pad_token_id=0):
    ks = jax.random.split(key, 3)
    scale = 0.02
    word = scale * jax.random.normal(ks[0], (vocab_size, hidden_size), jnp.float32)
    word = word.at[pad_token_id].set(0.0)   # nn.Embedding padding_idx row zero
    return {
        "word_emb": word,
        "pos_emb": scale * jax.random.normal(
            ks[1], (max_position_embeddings, hidden_size), jnp.float32),
        "type_emb": scale * jax.random.normal(
            ks[2], (type_vocab_size, hidden_size), jnp.float32),
        "ln_gamma": jnp.ones((hidden_size,), jnp.float32),   # LayerNorm defaults
        "ln_beta": jnp.zeros((hidden_size,), jnp.float32),
    }


if __name__ == "__main__":
    B, Sv, S_text, H = 2, 4, 10, 128      # batch, visual len, text len, hidden
    S = Sv + 2 + S_text                   # 16 total positions
    vocab_size, max_pos, type_vocab = 256, 64, 2

    key = jax.random.PRNGKey(0)
    k_ids, k_vis, k_vt, k_col, k_p = jax.random.split(key, 5)
    input_ids = jax.random.randint(k_ids, (B, S), 0, vocab_size, jnp.int32)
    visual = jax.random.normal(k_vis, (B, Sv, H), jnp.float32)
    video_time = jax.random.normal(k_vt, (B, H), jnp.float32)
    color = jax.random.normal(k_col, (B, H), jnp.float32)
    params = init_params(k_p, vocab_size, H, max_pos, type_vocab)

    fwd = jax.jit(functools.partial(my_bert_embeddings,
                                    layer_norm_eps=1e-12, tile_s=512))
    out = fwd(input_ids, visual, video_time, color, params)
    jax.block_until_ready(out)
    assert out.shape == (B, S, H)

    ref = _reference(input_ids, visual, video_time, color, params, 1e-12)
    err = float(jnp.max(jnp.abs(out - ref)))
    assert jnp.allclose(out, ref, atol=1e-3, rtol=1e-3), err

    print("KERNEL_OK")
</pallas_src>

<mosaic_0001>
module attributes {stable_mosaic.version = 11 : i64} {
  func.func @_embeddings_ln_kernel(%arg0: i32, %arg1: i32, %arg2: memref<1x16x128xf32, #tpu.memory_space<vmem>>, %arg3: memref<16x128xf32, #tpu.memory_space<vmem>>, %arg4: memref<1x6x128xf32, #tpu.memory_space<vmem>>, %arg5: memref<1x128xf32, #tpu.memory_space<vmem>>, %arg6: memref<1x128xf32, #tpu.memory_space<vmem>>, %arg7: memref<1x16x128xf32, #tpu.memory_space<vmem>>, %arg8: memref<16x128xf32, #tpu.memory_space<vmem>>) attributes {dimension_semantics = [#tpu.dimension_semantics<parallel>, #tpu.dimension_semantics<parallel>], iteration_bounds = array<i64: 1, 2>, scalar_prefetch = 0 : i64, scratch_operands = 1 : i64, tpu.core_type = #tpu.core_type<tc>, window_params = [{transform_indices = @transform_0, window_bounds = array<i64: 1, 16, 128>}, {transform_indices = @transform_1, window_bounds = array<i64: 16, 128>}, {transform_indices = @transform_2, window_bounds = array<i64: 1, 6, 128>}, {pipeline_mode = #tpu.pipeline_mode<synchronous>, transform_indices = @transform_3, window_bounds = array<i64: 1, 128>}, {pipeline_mode = #tpu.pipeline_mode<synchronous>, transform_indices = @transform_4, window_bounds = array<i64: 1, 128>}, {transform_indices = @transform_5, window_bounds = array<i64: 1, 16, 128>}]} {
    %c0 = arith.constant 0 : index
    %c0_0 = arith.constant 0 : index
    %c0_1 = arith.constant 0 : index
    %0 = vector.load %arg2[%c0, %c0_0, %c0_1] : memref<1x16x128xf32, #tpu.memory_space<vmem>>, vector<1x16x128xf32>
    %1 = vector.shape_cast %0 : vector<1x16x128xf32> to vector<16x128xf32>
    %c0_2 = arith.constant 0 : index
    %c0_3 = arith.constant 0 : index
    %2 = vector.load %arg3[%c0_2, %c0_3] : memref<16x128xf32, #tpu.memory_space<vmem>>, vector<16x128xf32>
    %3 = arith.addf %1, %2 : vector<16x128xf32>
    %c0_4 = arith.constant 0 : index
    %c0_5 = arith.constant 0 : index
    %4 = vector.load %arg8[%c0_4, %c0_5] : memref<16x128xf32, #tpu.memory_space<vmem>>, vector<16x128xf32>
    tpu.vector_store %arg8[%c0_4, %c0_5], %3 {strides = array<i32>} : memref<16x128xf32, #tpu.memory_space<vmem>>, vector<16x128xf32>,
    %c0_i32 = arith.constant 0 : i32
    %5 = arith.cmpi eq, %arg0, %c0_i32 : i32
    %6 = arith.extui %5 : i1 to i32
    %c0_i32_6 = arith.constant 0 : i32
    %7 = arith.cmpi ne, %6, %c0_i32_6 : i32
    scf.if %7 {
      %c0_21 = arith.constant 0 : index
      %c0_22 = arith.constant 0 : index
      %c0_23 = arith.constant 0 : index
      %38 = vector.load %arg4[%c0_21, %c0_22, %c0_23] : memref<1x6x128xf32, #tpu.memory_space<vmem>>, vector<1x6x128xf32>
      %39 = vector.shape_cast %38 : vector<1x6x128xf32> to vector<6x128xf32>
      %c0_24 = arith.constant 0 : index
      %c0_25 = arith.constant 0 : index
      %40 = vector.load %arg3[%c0_24, %c0_25] : memref<16x128xf32, #tpu.memory_space<vmem>>, vector<6x128xf32>
      %41 = arith.addf %39, %40 : vector<6x128xf32>
      %c0_26 = arith.constant 0 : index
      %c0_27 = arith.constant 0 : index
      %42 = vector.load %arg8[%c0_26, %c0_27] : memref<16x128xf32, #tpu.memory_space<vmem>>, vector<6x128xf32>
      tpu.vector_store %arg8[%c0_26, %c0_27], %41 {strides = array<i32>} : memref<16x128xf32, #tpu.memory_space<vmem>>, vector<6x128xf32>,
    } else {
    }
    %c0_7 = arith.constant 0 : index
    %c0_8 = arith.constant 0 : index
    %8 = vector.load %arg8[%c0_7, %c0_8] : memref<16x128xf32, #tpu.memory_space<vmem>>, vector<16x128xf32>
    %cst = arith.constant dense<0.000000e+00> : vector<16xf32>
    %9 = vector.multi_reduction <add>, %8, %cst [1] : vector<16x128xf32> to vector<16xf32>
    %10 = vector.shape_cast %9 : vector<16xf32> to vector<16x1xf32>
    %cst_9 = arith.constant 1.280000e+02 : f32
    %11 = vector.broadcast %cst_9 : f32 to vector<16x1xf32>
    %12 = arith.divf %10, %11 : vector<16x1xf32>
    %13 = arith.mulf %8, %8 : vector<16x128xf32>
    %cst_10 = arith.constant dense<0.000000e+00> : vector<16xf32>
    %14 = vector.multi_reduction <add>, %13, %cst_10 [1] : vector<16x128xf32> to vector<16xf32>
    %15 = vector.shape_cast %14 : vector<16xf32> to vector<16x1xf32>
    %cst_11 = arith.constant 1.280000e+02 : f32
    %16 = vector.broadcast %cst_11 : f32 to vector<16x1xf32>
    %17 = arith.divf %15, %16 : vector<16x1xf32>
    %18 = arith.mulf %12, %12 : vector<16x1xf32>
    %19 = arith.subf %17, %18 : vector<16x1xf32>
    %cst_12 = arith.constant 0.000000e+00 : f32
    %20 = vector.broadcast %cst_12 : f32 to vector<16x1xf32>
    %21 = arith.maximumf %19, %20 : vector<16x1xf32>
    %22 = vector.broadcast %12 : vector<16x1xf32> to vector<16x128xf32>
    %23 = arith.subf %8, %22 : vector<16x128xf32>
    %cst_13 = arith.constant 9.99999996E-13 : f32
    %24 = vector.broadcast %cst_13 : f32 to vector<16x1xf32>
    %25 = arith.addf %21, %24 : vector<16x1xf32>
    %26 = math.rsqrt %25 : vector<16x1xf32>
    %27 = vector.broadcast %26 : vector<16x1xf32> to vector<16x128xf32>
    %28 = arith.mulf %23, %27 : vector<16x128xf32>
    %c0_14 = arith.constant 0 : index
    %c0_15 = arith.constant 0 : index
    %29 = vector.load %arg5[%c0_14, %c0_15] : memref<1x128xf32, #tpu.memory_space<vmem>>, vector<1x128xf32>
    %30 = vector.broadcast %29 : vector<1x128xf32> to vector<16x128xf32>
    %31 = arith.mulf %28, %30 : vector<16x128xf32>
    %c0_16 = arith.constant 0 : index
    %c0_17 = arith.constant 0 : index
    %32 = vector.load %arg6[%c0_16, %c0_17] : memref<1x128xf32, #tpu.memory_space<vmem>>, vector<1x128xf32>
    %33 = vector.broadcast %32 : vector<1x128xf32> to vector<16x128xf32>
    %34 = arith.addf %31, %33 : vector<16x128xf32>
    %c0_18 = arith.constant 0 : index
    %c0_19 = arith.constant 0 : index
    %c0_20 = arith.constant 0 : index
    %35 = vector.load %arg7[%c0_18, %c0_19, %c0_20] : memref<1x16x128xf32, #tpu.memory_space<vmem>>, vector<1x16x128xf32>
    %36 = vector.shape_cast %35 : vector<1x16x128xf32> to vector<16x128xf32>
    %37 = vector.shape_cast %34 : vector<16x128xf32> to vector<1x16x128xf32>
    tpu.vector_store %arg7[%c0_18, %c0_19, %c0_20], %37 {strides = array<i32>} : memref<1x16x128xf32, #tpu.memory_space<vmem>>, vector<1x16x128xf32>,
    return
  }
  func.func @transform_0(%arg0: i32, %arg1: i32) -> (i32, i32, i32) {
    %c0_i32 = arith.constant 0 : i32
    %c0_i32_0 = arith.constant 0 : i32
    return %arg1, %arg0, %c0_i32 : i32, i32, i32
  }
  func.func @transform_1(%arg0: i32, %arg1: i32) -> (i32, i32) {
    %c0_i32 = arith.constant 0 : i32
    %c0_i32_0 = arith.constant 0 : i32
    return %arg0, %c0_i32 : i32, i32
  }
  func.func @transform_2(%arg0: i32, %arg1: i32) -> (i32, i32, i32) {
    %c0_i32 = arith.constant 0 : i32
    %c0_i32_0 = arith.constant 0 : i32
    %c0_i32_1 = arith.constant 0 : i32
    return %arg1, %c0_i32, %c0_i32_0 : i32, i32, i32
  }
  func.func @transform_3(%arg0: i32, %arg1: i32) -> (i32, i32) {
    %c0_i32 = arith.constant 0 : i32
    %c0_i32_0 = arith.constant 0 : i32
    %c0_i32_1 = arith.constant 0 : i32
    return %c0_i32, %c0_i32_0 : i32, i32
  }
  func.func @transform_4(%arg0: i32, %arg1: i32) -> (i32, i32) {
    %c0_i32 = arith.constant 0 : i32
    %c0_i32_0 = arith.constant 0 : i32
    %c0_i32_1 = arith.constant 0 : i32
    return %c0_i32, %c0_i32_0 : i32, i32
  }
  func.func @transform_5(%arg0: i32, %arg1: i32) -> (i32, i32, i32) {
    %c0_i32 = arith.constant 0 : i32
    %c0_i32_0 = arith.constant 0 : i32
    return %arg1, %arg0, %c0_i32 : i32, i32, i32
  }
}

</mosaic_0001>

<llo_original>
// kernel: my_bert_embeddings.1
$region0: #{my_bert_embeddings.1}
  #allocation0 [shape = 'u32[]', space=smem, size = 0x4, offset = 0x4, fixed_abs, tag = 'smem constant byte address 0x4 - core index']
  #allocation1 [shape = 'u32[72,128]{1,0:T(1,128)}', space=vmem, size = 0x9000, scoped, tag = 'internal scratch']
  #allocation2 [shape = 'f32[16,128]{1,0:T(8,128)}', space=vmem, size = 0x2000, scoped, tag = 'scratch operand']
  %s0 = inlined_call_operand.vmem [shape: f32[2,16,128], index: 0, kind: input, shape index: {}]
  %s1 = inlined_call_operand.vmem [shape: f32[16,128], index: 1, kind: input, shape index: {}]
  %s2 = inlined_call_operand.vmem [shape: f32[2,6,128], index: 2, kind: input, shape index: {}]
  %s3 = inlined_call_operand.vmem [shape: f32[1,128], index: 3, kind: input, shape index: {}]
  %s4 = inlined_call_operand.vmem [shape: f32[1,128], index: 4, kind: input, shape index: {}]
  %s5 = inlined_call_operand.hbm [shape: f32[2,16,128], index: 5, kind: output, shape index: {}]
  %s6 = sld [smem:[#allocation0]]
  $region57: #{my_bert_embeddings.1} parent=0
    _
  %s8 = ssub.s32 1, %s6
  %s9 = scalar_select 0, %s8, %s6
  $region1: #{my_bert_embeddings.1} parent=0
    #allocation3 [shape = 'u8[16384]{0}', space=vmem, size = 0x4000, scoped, tag = 'output window, operand 0']
    #allocation4 [shape = 's32[2]{0}', space=sflag, size = 0x8, scoped, tag = 'scoped memory for my_bert_embeddings.1']
    %10 = vsyncpa [#allocation4], 0
    %s11 = scalar_lea.sflag [#allocation4], 1
    %12 = vsyncpa %s11, 0
    loop: start=0, step=1, limit=4
    $region2: #{my_bert_embeddings.1} parent=1 // loop_pre_header
      _
    $region3: #{my_bert_embeddings.1} parent=1 // loop_header
      %s14 = sphi 0, %s18
      %p15 = scmp.ge.s32.totalorder %s14, 4
      %s21 = sphi 0, %s33
      %s22 = sphi 0, %s29
      %s23 = sphi 0, %s21
      %s24 = sphi 0, %s22
      %s25 = sphi 0, %s23
      %s26 = sphi 0, %s24
      %s38 = sphi 0, %s40
      %s41 = sphi 0, %s38
      %s42 = sphi 0, %s41
      %s58 = sphi 0, %s42
      %s64 = sphi 0, %s66
      %s67 = sphi 0, %s64
      %s68 = sphi 0, %s67
      %s84 = sphi 0, %s68
      %s90 = sphi 0, %s92
      %s93 = sphi 0, %s90
      %s94 = sphi 0, %s93
      %s110 = sphi 0, %s94
      %s114 = sphi 0, %s114
      %s116 = sphi 0, %s114
      %s117 = sphi 0, %s116
      %s131 = sphi 0, %s117
      %s135 = sphi 0, %s135
      %s137 = sphi 0, %s135
      %s138 = sphi 0, %s137
      %s152 = sphi 0, %s138
      %s160 = sphi 0, %s162
      %s163 = sphi 0, %s160
      %s164 = sphi 0, %s163
      %s180 = sphi 0, %s164
    $region4: #{my_bert_embeddings.1} parent=1 // loop_header_branch
      %17 = sbr.rel (%p15) target = $region8
    $region5: #{my_bert_embeddings.1} parent=1 // loop_body
      %s19 = ssub.s32 %s14, 1
      %s20 = ssub.s32 %s14, 2
      %s27 = sadd.s32 1, %s22
      %p28 = scmp.ge.s32.totalorder %s27, 2
      %s29 = scalar_select %p28, 0, %s27
      %s30 = sadd.s32 1, %s21
      %s31 = scalar_select %p28, %s30, %s21
      %p32 = scmp.ge.s32.totalorder %s31, 1
      %s33 = scalar_select %p32, 0, %s31
      %s34 = ssub.s32 %s22, %s29
      %s35 = ssub.s32 %s21, %s33
      %s36 = sor.u32 %s34, %s35
      %p37 = scmp.eq.s32.totalorder %s36, 0
      %s39 = sadd.s32 %s38, 1
      %s40 = scalar_select %p37, %s38, %s39
      %p43 = pneg %p37
      %p44 = scmp.eq.s32.totalorder %s14, 1
      %p45 = por %p43, %p44
      %p46 = scmp.ne.s32.totalorder %s38, %s41
      %p47 = scmp.eq.s32.totalorder %s14, 0
      %p48 = por %p46, %p47
      %p49 = scmp.ne.s32.totalorder %s38, %s41
      %p50 = scmp.eq.s32.totalorder %s19, 1
      %p51 = por %p49, %p50
      %p52 = scmp.ne.s32.totalorder %s41, %s42
      %p53 = scmp.eq.s32.totalorder %s19, 0
      %p54 = por %p52, %p53
      %p55 = scmp.ne.s32.totalorder %s41, %s42
      %p56 = scmp.eq.s32.totalorder %s20, 1
      %p57 = por %p55, %p56
      %p59 = scmp.ne.s32.totalorder %s42, %s58
      %p60 = scmp.eq.s32.totalorder %s20, 0
      %p61 = por %p59, %p60
      %s62 = ssub.s32 %s21, %s33
      %p63 = scmp.eq.s32.totalorder %s62, 0
      %s65 = sadd.s32 %s64, 1
      %s66 = scalar_select %p63, %s64, %s65
      %p69 = pneg %p63
      %p70 = scmp.eq.s32.totalorder %s14, 1
      %p71 = por %p69, %p70
      %p72 = scmp.ne.s32.totalorder %s64, %s67
      %p73 = scmp.eq.s32.totalorder %s14, 0
      %p74 = por %p72, %p73
      %p75 = scmp.ne.s32.totalorder %s64, %s67
      %p76 = scmp.eq.s32.totalorder %s19, 1
      %p77 = por %p75, %p76
      %p78 = scmp.ne.s32.totalorder %s67, %s68
      %p79 = scmp.eq.s32.totalorder %s19, 0
      %p80 = por %p78, %p79
      %p81 = scmp.ne.s32.totalorder %s67, %s68
      %p82 = scmp.eq.s32.totalorder %s20, 1
      %p83 = por %p81, %p82
      %p85 = scmp.ne.s32.totalorder %s68, %s84
      %p86 = scmp.eq.s32.totalorder %s20, 0
      %p87 = por %p85, %p86
      %s88 = ssub.s32 %s22, %s29
      %p89 = scmp.eq.s32.totalorder %s88, 0
      %s91 = sadd.s32 %s90, 1
      %s92 = scalar_select %p89, %s90, %s91
      %p95 = pneg %p89
      %p96 = scmp.eq.s32.totalorder %s14, 1
      %p97 = por %p95, %p96
      %p98 = scmp.ne.s32.totalorder %s90, %s93
      %p99 = scmp.eq.s32.totalorder %s14, 0
      %p100 = por %p98, %p99
      %p101 = scmp.ne.s32.totalorder %s90, %s93
      %p102 = scmp.eq.s32.totalorder %s19, 1
      %p103 = por %p101, %p102
      %p104 = scmp.ne.s32.totalorder %s93, %s94
      %p105 = scmp.eq.s32.totalorder %s19, 0
      %p106 = por %p104, %p105
      %p107 = scmp.ne.s32.totalorder %s93, %s94
      %p108 = scmp.eq.s32.totalorder %s20, 1
      %p109 = por %p107, %p108
      %p111 = scmp.ne.s32.totalorder %s94, %s110
      %p112 = scmp.eq.s32.totalorder %s20, 0
      %p113 = por %p111, %p112
      %s115 = sadd.s32 %s114, 1
      %p118 = scmp.eq.s32.totalorder %s14, 1
      %p119 = scmp.ne.s32.totalorder %s114, %s116
      %p120 = scmp.eq.s32.totalorder %s14, 0
      %p121 = por %p119, %p120
      %p122 = scmp.ne.s32.totalorder %s114, %s116
      %p123 = scmp.eq.s32.totalorder %s19, 1
      %p124 = por %p122, %p123
      %p125 = scmp.ne.s32.totalorder %s116, %s117
      %p126 = scmp.eq.s32.totalorder %s19, 0
      %p127 = por %p125, %p126
      %p128 = scmp.ne.s32.totalorder %s116, %s117
      %p129 = scmp.eq.s32.totalorder %s20, 1
      %p130 = por %p128, %p129
      %p132 = scmp.ne.s32.totalorder %s117, %s131
      %p133 = scmp.eq.s32.totalorder %s20, 0
      %p134 = por %p132, %p133
      %s136 = sadd.s32 %s135, 1
      %p139 = scmp.eq.s32.totalorder %s14, 1
      %p140 = scmp.ne.s32.totalorder %s135, %s137
      %p141 = scmp.eq.s32.totalorder %s14, 0
      %p142 = por %p140, %p141
      %p143 = scmp.ne.s32.totalorder %s135, %s137
      %p144 = scmp.eq.s32.totalorder %s19, 1
      %p145 = por %p143, %p144
      %p146 = scmp.ne.s32.totalorder %s137, %s138
      %p147 = scmp.eq.s32.totalorder %s19, 0
      %p148 = por %p146, %p147
      %p149 = scmp.ne.s32.totalorder %s137, %s138
      %p150 = scmp.eq.s32.totalorder %s20, 1
      %p151 = por %p149, %p150
      %p153 = scmp.ne.s32.totalorder %s138, %s152
      %p154 = scmp.eq.s32.totalorder %s20, 0
      %p155 = por %p153, %p154
      %s156 = ssub.s32 %s22, %s29
      %s157 = ssub.s32 %s21, %s33
      %s158 = sor.u32 %s156, %s157
      %p159 = scmp.eq.s32.totalorder %s158, 0
      %s161 = sadd.s32 %s160, 1
      %s162 = scalar_select %p159, %s160, %s161
      %p165 = pneg %p159
      %p166 = scmp.eq.s32.totalorder %s14, 1
      %p167 = por %p165, %p166
      %p168 = scmp.ne.s32.totalorder %s160, %s163
      %p169 = scmp.eq.s32.totalorder %s14, 0
      %p170 = por %p168, %p169
      %p171 = scmp.ne.s32.totalorder %s160, %s163
      %p172 = scmp.eq.s32.totalorder %s19, 1
      %p173 = por %p171, %p172
      %p174 = scmp.ne.s32.totalorder %s163, %s164
      %p175 = scmp.eq.s32.totalorder %s19, 0
      %p176 = por %p174, %p175
      %p177 = scmp.ne.s32.totalorder %s163, %s164
      %p178 = scmp.eq.s32.totalorder %s20, 1
      %p179 = por %p177, %p178
      %p181 = scmp.ne.s32.totalorder %s164, %s180
      %p182 = scmp.eq.s32.totalorder %s20, 0
      %p183 = por %p181, %p182
      %p184 = scmp.le.s32.totalorder 1, %s14
      %p185 = scmp.lt.s32.totalorder %s14, 3
      %p186 = pnand %p184, %p185
      %p187 = pneg %p186
      // Predicated region
      $region9: #{my_bert_embeddings.1} parent=5 // pred_check
        _
      $region10: #{my_bert_embeddings.1} parent=5 // pred_check_branch
        %189 = sbr.rel (%p186) target = $region12
      $region11: #{my_bert_embeddings.1} parent=5 // pred_region
        %s190 = ssub.s32 %s14, 1
        // Predicated region
        $region13: #{my_bert_embeddings.1} parent=11 // pred_check
          %p191 = pneg %p80
        $region14: #{my_bert_embeddings.1} parent=11 // pred_check_branch
          %193 = sbr.rel (%p191) target = $region16
        $region15: #{my_bert_embeddings.1} parent=11 // pred_region
          %s194 = smul.u32 2, %s23
          %p195 = scmp.lt.s32.totalorder %s194, 1
          %s196 = scalar_select %p195, %s194, 1
          %s197 = smul.addr %s196, 8
          %s198 = scalar_lea.vmem %s1, %s197
          %s199 = smul.u32 2, %s23
        $region16: #{my_bert_embeddings.1} parent=11 // pred_fallthru
          _
        // Predicated region
        $region17: #{my_bert_embeddings.1} parent=11 // pred_check
          %p200 = pneg %p127
        $region18: #{my_bert_embeddings.1} parent=11 // pred_check_branch
          %202 = sbr.rel (%p200) target = $region20
        $region19: #{my_bert_embeddings.1} parent=11 // pred_region
          _
        $region20: #{my_bert_embeddings.1} parent=11 // pred_fallthru
          _
        // Predicated region
        $region21: #{my_bert_embeddings.1} parent=11 // pred_check
          %p203 = pneg %p148
        $region22: #{my_bert_embeddings.1} parent=11 // pred_check_branch
          %205 = sbr.rel (%p203) target = $region24
        $region23: #{my_bert_embeddings.1} parent=11 // pred_region
          _
        $region24: #{my_bert_embeddings.1} parent=11 // pred_fallthru
          _
      $region12: #{my_bert_embeddings.1} parent=5 // pred_fallthru
        _
      %p206 = scmp.lt.s32.totalorder %s14, 2
      // Predicated region
      $region25: #{my_bert_embeddings.1} parent=5 // pred_check
        %p207 = pneg %p206
      $region26: #{my_bert_embeddings.1} parent=5 // pred_check_branch
        %209 = sbr.rel (%p207) target = $region28
      $region27: #{my_bert_embeddings.1} parent=5 // pred_region
        // Predicated region
        $region29: #{my_bert_embeddings.1} parent=27 // pred_check
          %p210 = pneg %p48
        $region30: #{my_bert_embeddings.1} parent=27 // pred_check_branch
          %212 = sbr.rel (%p210) target = $region32
        $region31: #{my_bert_embeddings.1} parent=27 // pred_region
          %s213 = smul.u32 2, %s21
          %p214 = scmp.lt.s32.totalorder %s22, 1
          %s215 = scalar_select %p214, %s22, 1
          %p216 = scmp.lt.s32.totalorder %s213, 1
          %s217 = scalar_select %p216, %s213, 1
          %s218 = smul.addr %s215, 2
          %s219 = sadd.s32 %s217, %s218
          %s220 = smul.addr %s219, 8
          %s221 = scalar_lea.vmem %s0, %s220
          %s222 = smul.u32 2, %s21
        $region32: #{my_bert_embeddings.1} parent=27 // pred_fallthru
          _
        // Predicated region
        $region33: #{my_bert_embeddings.1} parent=27 // pred_check
          %p223 = pneg %p100
        $region34: #{my_bert_embeddings.1} parent=27 // pred_check_branch
          %225 = sbr.rel (%p223) target = $region36
        $region35: #{my_bert_embeddings.1} parent=27 // pred_region
          %p226 = scmp.lt.s32.totalorder %s22, 1
          %s227 = scalar_select %p226, %s22, 1
          %s228 = smul.addr %s227, 8
          %s229 = scalar_lea.vmem %s2, %s228
        $region36: #{my_bert_embeddings.1} parent=27 // pred_fallthru
          _
      $region28: #{my_bert_embeddings.1} parent=5 // pred_fallthru
        _
      %p230 = scmp.le.s32.totalorder 1, %s14
      %p231 = scmp.lt.s32.totalorder %s14, 3
      %p232 = pnand %p230, %p231
      %p233 = pneg %p232
      // Predicated region
      $region37: #{my_bert_embeddings.1} parent=5 // pred_check
        _
      $region38: #{my_bert_embeddings.1} parent=5 // pred_check_branch
        %235 = sbr.rel (%p232) target = $region40
      $region39: #{my_bert_embeddings.1} parent=5 // pred_region
        %s236 = ssub.s32 %s14, 1
        %s237 = smul.u32 2, %s23
        %p238 = scmp.lt.s32.totalorder %s24, 1
        %s239 = scalar_select %p238, %s24, 1
        %p240 = scmp.lt.s32.totalorder %s237, 1
        %s241 = scalar_select %p240, %s237, 1
        %s242 = smul.addr %s239, 2
        %s243 = sadd.s32 %s241, %s242
        %s244 = smul.addr %s243, 8
        %s245 = scalar_lea.vmem %s0, %s244
        %p246 = pneg %p54
        %p247 = pneg %p51
        %s248 = smul.u32 2, %s23
        %p249 = scmp.lt.s32.totalorder %s248, 1
        %s250 = scalar_select %p249, %s248, 1
        %s251 = smul.addr %s250, 8
        %s252 = scalar_lea.vmem %s1, %s251
        %p253 = pneg %p80
        %p254 = pneg %p77
        %p255 = scmp.lt.s32.totalorder %s24, 1
        %s256 = scalar_select %p255, %s24, 1
        %s257 = smul.addr %s256, 8
        %s258 = scalar_lea.vmem %s2, %s257
        %p259 = pneg %p106
        %p260 = pneg %p103
        %p261 = pneg %p127
        %p262 = pneg %p124
        %p263 = pneg %p148
        %p264 = pneg %p145
        %p265 = pneg %p176
        %p266 = pneg %p173
        %s267 = sand.u32 %s163, 1
        %s268 = scalar_lea.sflag [#allocation4], %s267
        %s269 = sand.u32 %s163, 1
        %s270 = smul.addr %s269, 16
        %s271 = scalar_lea.vmem [#allocation3], %s270
        %s272 = smul.u32 2, %s23
        %p273 = scmp.lt.s32.totalorder %s24, 1
        %s274 = scalar_select %p273, %s24, 1
        %p275 = scmp.lt.s32.totalorder %s272, 1
        %s276 = scalar_select %p275, %s272, 1
        %s277 = smul.addr %s274, 2
        %s278 = sadd.s32 %s276, %s277
        %s279 = smul.addr %s278, 8
        %s280 = scalar_lea.vmem %s0, %s279
        %s281 = smul.u32 2, %s23
        %s282 = smul.u32 2, %s23
        %p283 = scmp.lt.s32.totalorder %s282, 1
        %s284 = scalar_select %p283, %s282, 1
        %s285 = smul.addr %s284, 8
        %s286 = scalar_lea.vmem %s1, %s285
        %s287 = smul.u32 2, %s23
        %p288 = scmp.lt.s32.totalorder %s24, 1
        %s289 = scalar_select %p288, %s24, 1
        %s290 = smul.addr %s289, 8
        %s291 = scalar_lea.vmem %s2, %s290
        %s292 = smul.u32 2, %s23
        %v293 = vld [vmem:[%s280] sm:$0xff]
        %v294 = vld [vmem:[%s280 + $0x8] sm:$0xff]
        %v295 = vld [vmem:[%s286] sm:$0xff]
        %v296 = vld [vmem:[%s286 + $0x8] sm:$0xff]
        %v297 = vadd.f32 %v293, %v295
        %v298 = vadd.f32 %v294, %v296
        %299 = vst [vmem:[#allocation2] sm:$0xff] %v297
        %300 = vst [vmem:[#allocation2 + $0x8] sm:$0xff] %v298
        %p301 = scmp.eq.s32.totalorder %s23, 0
        // Predicated region
        $region41: #{my_bert_embeddings.1} parent=39 // pred_check
          %p302 = pneg %p301
        $region42: #{my_bert_embeddings.1} parent=39 // pred_check_branch
          %304 = sbr.rel (%p302) target = $region44
        $region43: #{my_bert_embeddings.1} parent=39 // pred_region
          %v305 = vld [vmem:[%s291] sm:$0x3f]
          %v306 = vld [vmem:[%s286] sm:$0x3f]
          %v307 = vadd.f32 %v305, %v306
          %308 = vst [vmem:[#allocation2] sm:$0x3f] %v307
        $region44: #{my_bert_embeddings.1} parent=39 // pred_fallthru
          _
        %v309 = vld [vmem:[#allocation2] sm:$0xff]
        %v310 = vld [vmem:[#allocation2 + $0x8] sm:$0xff]
        %311 = vadd.xlane.f32.xlu0 %v309
        %v312 = vpop.xlane.xlu0 %311
        %313 = vadd.xlane.f32.xlu0 %v310
        %v314 = vpop.xlane.xlu0 %313
        %v315 = vrcp.pop 128.0
        %v316 = vmul.f32 128.0, %v315
        %v317 = vsub.f32 1.0, %v316
        %v318 = vmul.f32 %v315, %v317
        %v319 = vadd.f32 %v315, %v318
        %vm320 = vweird.f32 %v315
        %v321 = vsel %vm320, %v315, %v319
        %v322 = vmul.f32 %v312, %v321
        %v323 = vmul.f32 %v314, %v321
        %v324 = vmul.f32 %v309, %v309
        %v325 = vmul.f32 %v310, %v310
        %326 = vadd.xlane.f32.xlu0 %v324
        %v327 = vpop.xlane.xlu0 %326
        %328 = vadd.xlane.f32.xlu0 %v325
        %v329 = vpop.xlane.xlu0 %328
        %v330 = vmul.f32 %v327, %v321
        %v331 = vmul.f32 %v329, %v321
        %v332 = vmul.f32 %v322, %v322
        %v333 = vmul.f32 %v323, %v323
        %v334 = vsub.f32 %v330, %v332
        %v335 = vsub.f32 %v331, %v333
        %v336 = vmax.f32 %v334, 0.0
        %v337 = vmax.f32 %v335, 0.0
        %v338 = vsub.f32 %v309, %v322
        %v339 = vsub.f32 %v310, %v323
        %v340 = vadd.f32 %v336, 1e-12
        %v341 = vadd.f32 %v337, 1e-12
        %v342 = vrsqrt.pop %v340
        %v343 = vmul.f32 %v342, %v340
        %v344 = vmul.f32 %v343, %v342
        %v345 = vmul.f32 0.5, %v344
        %v346 = vsub.f32 1.5, %v345
        %v347 = vmul.f32 %v342, %v346
        %vm348 = vweird.f32 %v340
        %vm349 = vweird.f32 %v342
        %vm350 = vmor %vm348, %vm349
        %v351 = vsel %vm350, %v342, %v347
        %v352 = vrsqrt.pop %v341
        %v353 = vmul.f32 %v352, %v341
        %v354 = vmul.f32 %v353, %v352
        %v355 = vmul.f32 0.5, %v354
        %v356 = vsub.f32 1.5, %v355
        %v357 = vmul.f32 %v352, %v356
        %vm358 = vweird.f32 %v341
        %vm359 = vweird.f32 %v352
        %vm360 = vmor %vm358, %vm359
        %v361 = vsel %vm360, %v352, %v357
        %v362 = vmul.f32 %v338, %v351
        %v363 = vmul.f32 %v339, %v361
        %v364 = vld [vmem:[%s3] sm:$0x1]
        %v366 = vperm.slane %v364, 0
        %v368 = vmul.f32 %v362, %v366
        %v369 = vmul.f32 %v363, %v366
        %v370 = vld [vmem:[%s4] sm:$0x1]
        %v372 = vperm.slane %v370, 0
        %v374 = vadd.f32 %v368, %v372
        %v375 = vadd.f32 %v369, %v372
        %376 = vst [vmem:[%s271] sm:$0xff] %v374
        %377 = vst [vmem:[%s271 + $0x8] sm:$0xff] %v375
        %s378 = sand.u32 %s163, 1
        %s379 = scalar_lea.sflag [#allocation4], %s378
        %s380 = sand.u32 %s163, 1
        %s381 = smul.addr %s380, 16
        %s382 = scalar_lea.vmem [#allocation3], %s381
        // Predicated region
        $region45: #{my_bert_embeddings.1} parent=39 // pred_check
          %p383 = pneg %p173
        $region46: #{my_bert_embeddings.1} parent=39 // pred_check_branch
          %385 = sbr.rel (%p383) target = $region48
        $region47: #{my_bert_embeddings.1} parent=39 // pred_region
          %s386 = smul.u32 2, %s23
          %388 = vsyncadd %s379, 0
          %s389 = smul.addr %s24, 2
          %s390 = sadd.s32 %s386, %s389
          %s391 = smul.addr %s390, 8
          %s392 = scalar_lea.hbm %s5, %s391
          %s393 = sshll.u32 %s382, 4
          %s394 = int_to_ptr.vmem [resolvable:$true] %s393
          %s395 = sshll.u32 %s392, 4
          %s396 = int_to_ptr.hbm [resolvable:$true] %s395
          %401 = dma.vmem_to_hbm [thread:$0]  %s394, 256, %s396, %s379, 128, 128, 8
        $region48: #{my_bert_embeddings.1} parent=39 // pred_fallthru
          _
      $region40: #{my_bert_embeddings.1} parent=5 // pred_fallthru
        _
      %p402 = scmp.le.s32.totalorder 2, %s14
      // Predicated region
      $region49: #{my_bert_embeddings.1} parent=5 // pred_check
        %p403 = pneg %p402
      $region50: #{my_bert_embeddings.1} parent=5 // pred_check_branch
        %405 = sbr.rel (%p403) target = $region52
      $region51: #{my_bert_embeddings.1} parent=5 // pred_region
        %s406 = ssub.s32 %s14, 2
        // Predicated region
        $region53: #{my_bert_embeddings.1} parent=51 // pred_check
          %p407 = pneg %p179
        $region54: #{my_bert_embeddings.1} parent=51 // pred_check_branch
          %409 = sbr.rel (%p407) target = $region56
        $region55: #{my_bert_embeddings.1} parent=51 // pred_region
          %s410 = sand.u32 %s164, 1
          %s411 = scalar_lea.sflag [#allocation4], %s410
          %s412 = sand.u32 %s164, 1
          %s413 = smul.addr %s412, 16
          %s414 = scalar_lea.vmem [#allocation3], %s413
          %416 = dma.done %s411, 256
        $region56: #{my_bert_embeddings.1} parent=51 // pred_fallthru
          _
      $region52: #{my_bert_embeddings.1} parent=5 // pred_fallthru
        _
    $region6: #{my_bert_embeddings.1} parent=1 // loop_footer
      %s18 = sadd.s32 1, %s14
    $region7: #{my_bert_embeddings.1} parent=1 // loop_footer_branch
      %13 = sbr.rel target = $region3
    $region8: #{my_bert_embeddings.1} parent=1 // loop_exit
      _
    %417 = vsyncpa [#allocation4], 1
    %s418 = scalar_lea.sflag [#allocation4], 1
    %419 = vsyncpa %s418, 1

</llo_original>
